<compile_context>
chip_gen: v5e
topology: v5e:2x2
jax: 0.10.0
libtpu: 0.0.40
codegen_flags: <defaults>
</compile_context>

<pallas_src>
import functools
import math

import jax
import jax.numpy as jnp
from jax.experimental import pallas as pl
from jax.experimental.pallas import tpu as pltpu


# Set to jnp.bfloat16 on v6e/v7x for native-rate MXU matmuls (accumulation stays f32).
COMPUTE_DTYPE = jnp.float32


# ---------------------------------------------------------------------------
# small helpers
# ---------------------------------------------------------------------------

def _mm(a, b):
    """Matmul with optional bf16 operand cast, f32 accumulation."""
    return jnp.dot(a.astype(COMPUTE_DTYPE), b.astype(COMPUTE_DTYPE),
                   preferred_element_type=jnp.float32)


def _scores(q, k):
    """q @ k^T without an explicit transpose (contraction on last dims)."""
    return jnp.einsum("qd,kd->qk", q.astype(COMPUTE_DTYPE), k.astype(COMPUTE_DTYPE),
                      preferred_element_type=jnp.float32)


def _layernorm(z, g, b, eps):
    mean = jnp.mean(z, axis=-1, keepdims=True)
    var = jnp.mean((z - mean) ** 2, axis=-1, keepdims=True)
    return (z - mean) * jax.lax.rsqrt(var + eps) * g + b


def _softmax_last(e):
    e_max = jnp.max(e, axis=-1, keepdims=True)
    p = jnp.exp(e - e_max)
    return p / jnp.sum(p, axis=-1, keepdims=True)


def _wspec(shape):
    """Whole-array block, constant index map, single-buffered (weights/constants)."""
    zeros = (0,) * len(shape)
    idx = lambda *_: zeros
    try:
        return pl.BlockSpec(shape, idx, pipeline_mode=pl.Buffered(buffer_count=1))
    except (TypeError, AttributeError):      # older Pallas without pipeline_mode
        return pl.BlockSpec(shape, idx)


def _vmem_limit(needed_bytes, headroom=4 << 20):
    return int(min(max(int(needed_bytes) + headroom, 32 << 20), 64 << 20))


# ---------------------------------------------------------------------------
# embedding: in-VMEM row gather from the (small) token table + *sqrt(H) + pos add
# ---------------------------------------------------------------------------

def _embed_kernel(ids_ref, pos_ref, tok_ref, out_ref, *, scale, L):
    b = pl.program_id(0)
    rows = [tok_ref[pl.ds(ids_ref[b, l], 1), :] for l in range(L)]   # L x [1, H]
    emb = jnp.concatenate(rows, axis=0)                              # [L, H]
    out_ref[0] = emb * scale + pos_ref[...]


def embed(trg_ids, tok_table, pos_rows, scale):
    B, L = trg_ids.shape
    V, H = tok_table.shape
    needed = 4 * (V * H + L * H) + 4 * 2 * (L * H)
    grid_spec = pltpu.PrefetchScalarGridSpec(
        num_scalar_prefetch=1,                 # trg ids -> SMEM
        grid=(B,),
        in_specs=[
            _wspec((L, H)),                    # shared positional rows (DMA'd once)
            _wspec((V, H)),                    # whole token table in VMEM (DMA'd once)
        ],
        out_specs=pl.BlockSpec((1, L, H), lambda b, ids: (b, 0, 0)),
    )
    return pl.pallas_call(
        functools.partial(_embed_kernel, scale=scale, L=L),
        out_shape=jax.ShapeDtypeStruct((B, L, H), jnp.float32),
        grid_spec=grid_spec,
        compiler_params=pltpu.CompilerParams(
            dimension_semantics=("parallel",),
            vmem_limit_bytes=_vmem_limit(needed)),
    )(trg_ids.astype(jnp.int32), pos_rows, tok_table)


# ---------------------------------------------------------------------------
# ONE fused kernel per decoder layer:
#   self-attn(mask) -> +res -> LN1 -> cross-attn(no mask) -> +res -> LN2
#   -> FFN -> +res -> LN3
# ---------------------------------------------------------------------------

def _decoder_layer_kernel(
        x_ref, enc_ref, mask_ref,
        sa_wqkv_ref, sa_bqkv_ref, sa_wo_ref, sa_bo_ref, ln1_g_ref, ln1_b_ref,
        ca_wq_ref, ca_bq_ref, ca_wkv_ref, ca_bkv_ref, ca_wo_ref, ca_bo_ref,
        ln2_g_ref, ln2_b_ref,
        ff_w1_ref, ff_b1_ref, ff_w2_ref, ff_b2_ref, ln3_g_ref, ln3_b_ref,
        *out_refs, n_heads, inv_scale, eps, return_attn):
    o_ref = out_refs[0]
    attn_ref = out_refs[1] if return_attn else None

    x = x_ref[0]                                       # [L, H]
    enc = enc_ref[0]                                   # [Lk, H]
    L, H = x.shape
    Dh = H // n_heads

    # ---------------- self attention (masked) ----------------
    qkv = _mm(x, sa_wqkv_ref[...]) + sa_bqkv_ref[...]  # [L, 3H]
    q, k, v = qkv[:, :H], qkv[:, H:2 * H], qkv[:, 2 * H:3 * H]
    mask_zero = mask_ref[0, 0] == 0.0                  # hoisted out of the head loop
    ctxs = []
    for h in range(n_heads):
        qh = q[:, h * Dh:(h + 1) * Dh]
        kh = k[:, h * Dh:(h + 1) * Dh]
        vh = v[:, h * Dh:(h + 1) * Dh]
        e = _scores(qh, kh) * inv_scale
        e = jnp.where(mask_zero, -1e10, e)             # masked_fill(mask==0, -1e10)
        a = _softmax_last(e)
        ctxs.append(_mm(a, vh))                        # [L, Dh]
    ctx = jnp.concatenate(ctxs, axis=-1)               # [L, H]
    sa_out = _mm(ctx, sa_wo_ref[...]) + sa_bo_ref[...]
    t = _layernorm(x + sa_out, ln1_g_ref[...], ln1_b_ref[...], eps)

    # -------- cross attention (src_mask is None in the reference) --------
    q2 = _mm(t, ca_wq_ref[...]) + ca_bq_ref[...]       # [L, H]
    kv = _mm(enc, ca_wkv_ref[...]) + ca_bkv_ref[...]   # [Lk, 2H]
    k2, v2 = kv[:, :H], kv[:, H:]
    ctxs = []
    for h in range(n_heads):
        qh = q2[:, h * Dh:(h + 1) * Dh]
        kh = k2[:, h * Dh:(h + 1) * Dh]
        vh = v2[:, h * Dh:(h + 1) * Dh]
        e = _scores(qh, kh) * inv_scale
        a = _softmax_last(e)                           # all-ones mask -> plain softmax
        if return_attn:
            attn_ref[0, h] = a
        ctxs.append(_mm(a, vh))
    ctx = jnp.concatenate(ctxs, axis=-1)               # [L, H]
    ca_out = _mm(ctx, ca_wo_ref[...]) + ca_bo_ref[...]
    t = _layernorm(t + ca_out, ln2_g_ref[...], ln2_b_ref[...], eps)

    # ---------------- position-wise feed-forward ----------------
    hid = jnp.maximum(_mm(t, ff_w1_ref[...]) + ff_b1_ref[...], 0.0)
    y = _mm(hid, ff_w2_ref[...]) + ff_b2_ref[...]
    o_ref[0] = _layernorm(t + y, ln3_g_ref[...], ln3_b_ref[...], eps)


def decoder_layer_block(x, enc, mask, p, n_heads, need_attn, eps=1e-5):
    B, L, H = x.shape
    Lk = enc.shape[1]
    PF = p["ff_w1"].shape[1]
    inv_scale = 1.0 / math.sqrt(H // n_heads)

    weights = [
        p["sa_wqkv"], p["sa_bqkv"].reshape(1, -1), p["sa_wo"], p["sa_bo"].reshape(1, -1),
        p["ln1_g"].reshape(1, -1), p["ln1_b"].reshape(1, -1),
        p["ca_wq"], p["ca_bq"].reshape(1, -1), p["ca_wkv"], p["ca_bkv"].reshape(1, -1),
        p["ca_wo"], p["ca_bo"].reshape(1, -1),
        p["ln2_g"].reshape(1, -1), p["ln2_b"].reshape(1, -1),
        p["ff_w1"], p["ff_b1"].reshape(1, -1), p["ff_w2"], p["ff_b2"].reshape(1, -1),
        p["ln3_g"].reshape(1, -1), p["ln3_b"].reshape(1, -1),
    ]

    in_specs = [
        pl.BlockSpec((1, L, H), lambda b: (b, 0, 0)),
        pl.BlockSpec((1, Lk, H), lambda b: (b, 0, 0)),
        pl.BlockSpec((1, 1, L, L), lambda b: (b, 0, 0, 0)),
    ] + [_wspec(w.shape) for w in weights]

    o_shape = jax.ShapeDtypeStruct((B, L, H), jnp.float32)
    o_spec = pl.BlockSpec((1, L, H), lambda b: (b, 0, 0))
    if need_attn:
        out_shape = (o_shape, jax.ShapeDtypeStruct((B, n_heads, L, Lk), jnp.float32))
        out_specs = (o_spec, pl.BlockSpec((1, n_heads, L, Lk), lambda b: (b, 0, 0, 0)))
    else:
        out_shape = o_shape
        out_specs = o_spec

    weight_bytes = sum(int(w.size) * w.dtype.itemsize for w in weights)  # single-buffered
    act_bytes = 4 * 2 * (2 * L * H + Lk * H + L * L
                         + (n_heads * L * Lk if need_attn else 0))       # double-buffered
    scratch_bytes = 4 * (L * (3 * H + PF) + n_heads * L * max(L, Lk))    # intermediates
    vmem_limit = _vmem_limit(weight_bytes + act_bytes + scratch_bytes)

    kern = functools.partial(_decoder_layer_kernel, n_heads=n_heads,
                             inv_scale=inv_scale, eps=eps, return_attn=need_attn)
    res = pl.pallas_call(
        kern,
        out_shape=out_shape,
        grid=(B,),
        in_specs=in_specs,
        out_specs=out_specs,
        compiler_params=pltpu.CompilerParams(
            dimension_semantics=("parallel",),
            vmem_limit_bytes=vmem_limit),
    )(x, enc, mask, *weights)
    if need_attn:
        return res
    return res, None


# ---------------------------------------------------------------------------
# final vocab projection: (M, N)-tiled, both grid axes parallel
# ---------------------------------------------------------------------------

def _linear_kernel(x_ref, w_ref, b_ref, o_ref):
    o_ref[...] = _mm(x_ref[...], w_ref[...]) + b_ref[...]


def linear(x, w, b, *, tile_m=256, tile_n=1024):
    M, K = x.shape
    N = w.shape[1]
    tile_m = min(tile_m, M)     # gates the M-split: tiny M -> single M block
    tile_n = min(tile_n, N)     # vocab-dim tiling streams the weight through VMEM
    grid = (pl.cdiv(M, tile_m), pl.cdiv(N, tile_n))
    needed = 4 * 2 * (tile_m * K + K * tile_n + tile_n + tile_m * tile_n)
    return pl.pallas_call(
        _linear_kernel,
        out_shape=jax.ShapeDtypeStruct((M, N), jnp.float32),
        grid=grid,
        in_specs=[
            pl.BlockSpec((tile_m, K), lambda i, j: (i, 0)),
            pl.BlockSpec((K, tile_n), lambda i, j: (0, j)),
            pl.BlockSpec((1, tile_n), lambda i, j: (0, j)),
        ],
        out_specs=pl.BlockSpec((tile_m, tile_n), lambda i, j: (i, j)),
        compiler_params=pltpu.CompilerParams(
            dimension_semantics=("parallel", "parallel"),
            vmem_limit_bytes=_vmem_limit(needed)),
    )(x, w, b.reshape(1, N))


# ---------------------------------------------------------------------------
# model glue
# ---------------------------------------------------------------------------

def pose_decoder_forward(params, trg_ids, enc_src, trg_mask, *, n_heads):
    B, L = trg_ids.shape
    H = params["tok_emb"].shape[1]

    # tok_emb(trg) * sqrt(H) + pos_emb(arange(L)), gathered in-kernel
    trg = embed(trg_ids, params["tok_emb"], params["pos_emb"][:L], math.sqrt(H))

    attention = None
    n_layers = len(params["layers"])
    for i, lp in enumerate(params["layers"]):
        trg, attn = decoder_layer_block(trg, enc_src, trg_mask, lp, n_heads,
                                        need_attn=(i == n_layers - 1))
        if attn is not None:
            attention = attn

    out = linear(trg.reshape(B * L, H), params["w_out"], params["b_out"])
    return out.reshape(B, L, -1), attention


# ---------------------------------------------------------------------------
# deterministic parameter init (QKV / KV weights stored pre-fused)
# ---------------------------------------------------------------------------

def init_params(key, output_dim, hid_dim, n_layers, pf_dim, max_length):
    cnt = [0]

    def w(shape):
        cnt[0] += 1
        return jax.random.normal(jax.random.fold_in(key, cnt[0]), shape,
                                 jnp.float32) * 0.02

    def layer():
        return dict(
            sa_wqkv=w((hid_dim, 3 * hid_dim)), sa_bqkv=w((3 * hid_dim,)),
            sa_wo=w((hid_dim, hid_dim)), sa_bo=w((hid_dim,)),
            ca_wq=w((hid_dim, hid_dim)), ca_bq=w((hid_dim,)),
            ca_wkv=w((hid_dim, 2 * hid_dim)), ca_bkv=w((2 * hid_dim,)),
            ca_wo=w((hid_dim, hid_dim)), ca_bo=w((hid_dim,)),
            ff_w1=w((hid_dim, pf_dim)), ff_b1=w((pf_dim,)),
            ff_w2=w((pf_dim, hid_dim)), ff_b2=w((hid_dim,)),
            ln1_g=jnp.ones((hid_dim,), jnp.float32), ln1_b=jnp.zeros((hid_dim,), jnp.float32),
            ln2_g=jnp.ones((hid_dim,), jnp.float32), ln2_b=jnp.zeros((hid_dim,), jnp.float32),
            ln3_g=jnp.ones((hid_dim,), jnp.float32), ln3_b=jnp.zeros((hid_dim,), jnp.float32),
        )

    return dict(
        tok_emb=w((output_dim, hid_dim)),
        pos_emb=w((max_length, hid_dim)),
        layers=[layer() for _ in range(n_layers)],
        w_out=w((hid_dim, output_dim)),
        b_out=w((output_dim,)),
    )


# ---------------------------------------------------------------------------
# demo
# ---------------------------------------------------------------------------

if __name__ == "__main__":
    B, L_trg, L_src = 2, 8, 8
    OUTPUT_DIM, HID, N_LAYERS, N_HEADS, PF, MAX_LEN = 64, 32, 2, 4, 64, 16

    key = jax.random.PRNGKey(0)
    kp, kt, ke = jax.random.split(key, 3)

    params = init_params(kp, OUTPUT_DIM, HID, N_LAYERS, PF, MAX_LEN)
    trg_ids = jax.random.randint(kt, (B, L_trg), 0, OUTPUT_DIM, dtype=jnp.int32)
    enc_src = jax.random.normal(ke, (B, L_src, HID), jnp.float32)
    # causal target mask [B, 1, L_trg, L_trg]
    trg_mask = jnp.broadcast_to(
        jnp.tril(jnp.ones((L_trg, L_trg), jnp.float32))[None, None],
        (B, 1, L_trg, L_trg))

    output, attention = pose_decoder_forward(
        params, trg_ids, enc_src, trg_mask, n_heads=N_HEADS)
    jax.block_until_ready((output, attention))

    assert output.shape == (B, L_trg, OUTPUT_DIM)
    assert attention.shape == (B, N_HEADS, L_trg, L_src)
    print("KERNEL_OK")
</pallas_src>

<mosaic_0001>
module attributes {stable_mosaic.version = 11 : i64} {
  func.func @_embed_kernel(%arg0: i32, %arg1: memref<2x8xi32, #tpu.memory_space<smem>>, %arg2: memref<8x32xf32, #tpu.memory_space<vmem>>, %arg3: memref<64x32xf32, #tpu.memory_space<vmem>>, %arg4: memref<1x8x32xf32, #tpu.memory_space<vmem>>) attributes {dimension_semantics = [#tpu.dimension_semantics<parallel>], iteration_bounds = array<i64: 2>, scalar_prefetch = 1 : i64, scratch_operands = 0 : i64, tpu.core_type = #tpu.core_type<tc>, window_params = [{pipeline_mode = #tpu.pipeline_mode<synchronous>, transform_indices = @transform_0, window_bounds = array<i64: 8, 32>}, {pipeline_mode = #tpu.pipeline_mode<synchronous>, transform_indices = @transform_1, window_bounds = array<i64: 64, 32>}, {transform_indices = @transform_2, window_bounds = array<i64: 1, 8, 32>}]} {
    %0 = arith.index_cast %arg0 : i32 to index
    %c0 = arith.constant 0 : index
    %1 = memref.load %arg1[%0, %c0] : memref<2x8xi32, #tpu.memory_space<smem>>
    %2 = arith.index_cast %1 : i32 to index
    %c0_0 = arith.constant 0 : index
    %3 = vector.load %arg3[%2, %c0_0] : memref<64x32xf32, #tpu.memory_space<vmem>>, vector<1x32xf32>
    %4 = arith.index_cast %arg0 : i32 to index
    %c1 = arith.constant 1 : index
    %5 = memref.load %arg1[%4, %c1] : memref<2x8xi32, #tpu.memory_space<smem>>
    %6 = arith.index_cast %5 : i32 to index
    %c0_1 = arith.constant 0 : index
    %7 = vector.load %arg3[%6, %c0_1] : memref<64x32xf32, #tpu.memory_space<vmem>>, vector<1x32xf32>
    %8 = arith.index_cast %arg0 : i32 to index
    %c2 = arith.constant 2 : index
    %9 = memref.load %arg1[%8, %c2] : memref<2x8xi32, #tpu.memory_space<smem>>
    %10 = arith.index_cast %9 : i32 to index
    %c0_2 = arith.constant 0 : index
    %11 = vector.load %arg3[%10, %c0_2] : memref<64x32xf32, #tpu.memory_space<vmem>>, vector<1x32xf32>
    %12 = arith.index_cast %arg0 : i32 to index
    %c3 = arith.constant 3 : index
    %13 = memref.load %arg1[%12, %c3] : memref<2x8xi32, #tpu.memory_space<smem>>
    %14 = arith.index_cast %13 : i32 to index
    %c0_3 = arith.constant 0 : index
    %15 = vector.load %arg3[%14, %c0_3] : memref<64x32xf32, #tpu.memory_space<vmem>>, vector<1x32xf32>
    %16 = arith.index_cast %arg0 : i32 to index
    %c4 = arith.constant 4 : index
    %17 = memref.load %arg1[%16, %c4] : memref<2x8xi32, #tpu.memory_space<smem>>
    %18 = arith.index_cast %17 : i32 to index
    %c0_4 = arith.constant 0 : index
    %19 = vector.load %arg3[%18, %c0_4] : memref<64x32xf32, #tpu.memory_space<vmem>>, vector<1x32xf32>
    %20 = arith.index_cast %arg0 : i32 to index
    %c5 = arith.constant 5 : index
    %21 = memref.load %arg1[%20, %c5] : memref<2x8xi32, #tpu.memory_space<smem>>
    %22 = arith.index_cast %21 : i32 to index
    %c0_5 = arith.constant 0 : index
    %23 = vector.load %arg3[%22, %c0_5] : memref<64x32xf32, #tpu.memory_space<vmem>>, vector<1x32xf32>
    %24 = arith.index_cast %arg0 : i32 to index
    %c6 = arith.constant 6 : index
    %25 = memref.load %arg1[%24, %c6] : memref<2x8xi32, #tpu.memory_space<smem>>
    %26 = arith.index_cast %25 : i32 to index
    %c0_6 = arith.constant 0 : index
    %27 = vector.load %arg3[%26, %c0_6] : memref<64x32xf32, #tpu.memory_space<vmem>>, vector<1x32xf32>
    %28 = arith.index_cast %arg0 : i32 to index
    %c7 = arith.constant 7 : index
    %29 = memref.load %arg1[%28, %c7] : memref<2x8xi32, #tpu.memory_space<smem>>
    %30 = arith.index_cast %29 : i32 to index
    %c0_7 = arith.constant 0 : index
    %31 = vector.load %arg3[%30, %c0_7] : memref<64x32xf32, #tpu.memory_space<vmem>>, vector<1x32xf32>
    %32 = tpu.concatenate %3, %7, %11, %15, %19, %23, %27, %31 in 0 : vector<1x32xf32>, vector<1x32xf32>, vector<1x32xf32>, vector<1x32xf32>, vector<1x32xf32>, vector<1x32xf32>, vector<1x32xf32>, vector<1x32xf32> -> vector<8x32xf32>
    %cst = arith.constant 5.65685415 : f32
    %33 = vector.broadcast %cst : f32 to vector<8x32xf32>
    %34 = arith.mulf %32, %33 : vector<8x32xf32>
    %c0_8 = arith.constant 0 : index
    %c0_9 = arith.constant 0 : index
    %35 = vector.load %arg2[%c0_8, %c0_9] : memref<8x32xf32, #tpu.memory_space<vmem>>, vector<8x32xf32>
    %36 = arith.addf %34, %35 : vector<8x32xf32>
    %c0_10 = arith.constant 0 : index
    %c0_11 = arith.constant 0 : index
    %c0_12 = arith.constant 0 : index
    %37 = vector.load %arg4[%c0_10, %c0_11, %c0_12] : memref<1x8x32xf32, #tpu.memory_space<vmem>>, vector<1x8x32xf32>
    %38 = vector.shape_cast %37 : vector<1x8x32xf32> to vector<8x32xf32>
    %39 = vector.shape_cast %36 : vector<8x32xf32> to vector<1x8x32xf32>
    tpu.vector_store %arg4[%c0_10, %c0_11, %c0_12], %39 {strides = array<i32>} : memref<1x8x32xf32, #tpu.memory_space<vmem>>, vector<1x8x32xf32>,
    return
  }
  func.func @transform_0(%arg0: i32, %arg1: memref<2x8xi32, #tpu.memory_space<smem>>) -> (i32, i32) {
    %c0_i32 = arith.constant 0 : i32
    %c0_i32_0 = arith.constant 0 : i32
    %c0_i32_1 = arith.constant 0 : i32
    return %c0_i32, %c0_i32_0 : i32, i32
  }
  func.func @transform_1(%arg0: i32, %arg1: memref<2x8xi32, #tpu.memory_space<smem>>) -> (i32, i32) {
    %c0_i32 = arith.constant 0 : i32
    %c0_i32_0 = arith.constant 0 : i32
    %c0_i32_1 = arith.constant 0 : i32
    return %c0_i32, %c0_i32_0 : i32, i32
  }
  func.func @transform_2(%arg0: i32, %arg1: memref<2x8xi32, #tpu.memory_space<smem>>) -> (i32, i32, i32) {
    %c0_i32 = arith.constant 0 : i32
    %c0_i32_0 = arith.constant 0 : i32
    %c0_i32_1 = arith.constant 0 : i32
    return %arg0, %c0_i32, %c0_i32_0 : i32, i32, i32
  }
}

</mosaic_0001>

<llo_original>
// kernel: tpu_custom_call.1
$region0: #{tpu_custom_call.1}
  #allocation0 [shape = 'u32[]', space=smem, size = 0x4, offset = 0x4, fixed_abs, tag = 'smem constant byte address 0x4 - core index']
  #allocation1 [shape = 'u32[72,128]{1,0:T(1,128)}', space=vmem, size = 0x9000, scoped, tag = 'internal scratch']
  #allocation2 [shape = 's32[1]{0}', space=sflag, size = 0x4, scoped, tag = 'scoped memory for tpu_custom_call.1']
  #allocation3 [shape = 'u8[1024]{0}', space=smem, size = 0x400, scoped, tag = 'prefetched SMEM operand 0']
  %s0 = inlined_call_operand.vmem [shape: s32[2,8], index: 0, kind: input, shape index: {}]
  %s1 = inlined_call_operand.vmem [shape: f32[8,32], index: 1, kind: input, shape index: {}]
  %s2 = inlined_call_operand.vmem [shape: f32[64,32], index: 2, kind: input, shape index: {}]
  %s3 = inlined_call_operand.hbm [shape: f32[2,8,32], index: 3, kind: output, shape index: {}]
  %s4 = sld [smem:[#allocation0]]
  $region41: #{tpu_custom_call.1} parent=0
    _
  %s6 = ssub.s32 1, %s4
  %s7 = scalar_select 0, %s6, %s4
  %s9 = sshll.u32 %s0, 4
  %s10 = int_to_ptr.vmem [resolvable:$true] %s9
  %12 = dma.vmem_to_smem %s10, 32, [#allocation3], [#allocation2]
  %14 = dma.done [#allocation2], 32
  %15 = sfence
  $region1: #{tpu_custom_call.1} parent=0
    #allocation4 [shape = 'u8[8192]{0}', space=vmem, size = 0x2000, scoped, tag = 'output window, operand 0']
    #allocation5 [shape = 's32[2]{0}', space=sflag, size = 0x8, scoped, tag = 'scoped memory for tpu_custom_call.1']
    %16 = vsyncpa [#allocation5], 0
    %s17 = scalar_lea.sflag [#allocation5], 1
    %18 = vsyncpa %s17, 0
    loop: start=0, step=1, limit=4
    $region2: #{tpu_custom_call.1} parent=1 // loop_pre_header
      _
    $region3: #{tpu_custom_call.1} parent=1 // loop_header
      %s20 = sphi 0, %s24
      %p21 = scmp.ge.s32.totalorder %s20, 4
      %s28 = sphi 0, %s28
      %s30 = sphi 0, %s28
      %s31 = sphi 0, %s30
      %s45 = sphi 0, %s31
      %s49 = sphi 0, %s49
      %s51 = sphi 0, %s49
      %s52 = sphi 0, %s51
      %s66 = sphi 0, %s52
      %s72 = sphi 0, %s74
      %s75 = sphi 0, %s72
      %s76 = sphi 0, %s75
      %s92 = sphi 0, %s76
    $region4: #{tpu_custom_call.1} parent=1 // loop_header_branch
      %23 = sbr.rel (%p21) target = $region8
    $region5: #{tpu_custom_call.1} parent=1 // loop_body
      %s25 = ssub.s32 %s20, 1
      %s26 = ssub.s32 %s20, 2
      %s27 = sadd.s32 %s20, 1
      %s29 = sadd.s32 %s28, 1
      %p32 = scmp.eq.s32.totalorder %s20, 1
      %p33 = scmp.ne.s32.totalorder %s28, %s30
      %p34 = scmp.eq.s32.totalorder %s20, 0
      %p35 = por %p33, %p34
      %p36 = scmp.ne.s32.totalorder %s28, %s30
      %p37 = scmp.eq.s32.totalorder %s25, 1
      %p38 = por %p36, %p37
      %p39 = scmp.ne.s32.totalorder %s30, %s31
      %p40 = scmp.eq.s32.totalorder %s25, 0
      %p41 = por %p39, %p40
      %p42 = scmp.ne.s32.totalorder %s30, %s31
      %p43 = scmp.eq.s32.totalorder %s26, 1
      %p44 = por %p42, %p43
      %p46 = scmp.ne.s32.totalorder %s31, %s45
      %p47 = scmp.eq.s32.totalorder %s26, 0
      %p48 = por %p46, %p47
      %s50 = sadd.s32 %s49, 1
      %p53 = scmp.eq.s32.totalorder %s20, 1
      %p54 = scmp.ne.s32.totalorder %s49, %s51
      %p55 = scmp.eq.s32.totalorder %s20, 0
      %p56 = por %p54, %p55
      %p57 = scmp.ne.s32.totalorder %s49, %s51
      %p58 = scmp.eq.s32.totalorder %s25, 1
      %p59 = por %p57, %p58
      %p60 = scmp.ne.s32.totalorder %s51, %s52
      %p61 = scmp.eq.s32.totalorder %s25, 0
      %p62 = por %p60, %p61
      %p63 = scmp.ne.s32.totalorder %s51, %s52
      %p64 = scmp.eq.s32.totalorder %s26, 1
      %p65 = por %p63, %p64
      %p67 = scmp.ne.s32.totalorder %s52, %s66
      %p68 = scmp.eq.s32.totalorder %s26, 0
      %p69 = por %p67, %p68
      %s70 = ssub.s32 %s20, %s27
      %p71 = scmp.eq.s32.totalorder %s70, 0
      %s73 = sadd.s32 %s72, 1
      %s74 = scalar_select %p71, %s72, %s73
      %p77 = pneg %p71
      %p78 = scmp.eq.s32.totalorder %s20, 1
      %p79 = por %p77, %p78
      %p80 = scmp.ne.s32.totalorder %s72, %s75
      %p81 = scmp.eq.s32.totalorder %s20, 0
      %p82 = por %p80, %p81
      %p83 = scmp.ne.s32.totalorder %s72, %s75
      %p84 = scmp.eq.s32.totalorder %s25, 1
      %p85 = por %p83, %p84
      %p86 = scmp.ne.s32.totalorder %s75, %s76
      %p87 = scmp.eq.s32.totalorder %s25, 0
      %p88 = por %p86, %p87
      %p89 = scmp.ne.s32.totalorder %s75, %s76
      %p90 = scmp.eq.s32.totalorder %s26, 1
      %p91 = por %p89, %p90
      %p93 = scmp.ne.s32.totalorder %s76, %s92
      %p94 = scmp.eq.s32.totalorder %s26, 0
      %p95 = por %p93, %p94
      %p96 = scmp.le.s32.totalorder 1, %s20
      %p97 = scmp.lt.s32.totalorder %s20, 3
      %p98 = pnand %p96, %p97
      %p99 = pneg %p98
      // Predicated region
      $region9: #{tpu_custom_call.1} parent=5 // pred_check
        _
      $region10: #{tpu_custom_call.1} parent=5 // pred_check_branch
        %101 = sbr.rel (%p98) target = $region12
      $region11: #{tpu_custom_call.1} parent=5 // pred_region
        %s102 = ssub.s32 %s20, 1
        // Predicated region
        $region13: #{tpu_custom_call.1} parent=11 // pred_check
          %p103 = pneg %p41
        $region14: #{tpu_custom_call.1} parent=11 // pred_check_branch
          %105 = sbr.rel (%p103) target = $region16
        $region15: #{tpu_custom_call.1} parent=11 // pred_region
          _
        $region16: #{tpu_custom_call.1} parent=11 // pred_fallthru
          _
        // Predicated region
        $region17: #{tpu_custom_call.1} parent=11 // pred_check
          %p106 = pneg %p62
        $region18: #{tpu_custom_call.1} parent=11 // pred_check_branch
          %108 = sbr.rel (%p106) target = $region20
        $region19: #{tpu_custom_call.1} parent=11 // pred_region
          _
        $region20: #{tpu_custom_call.1} parent=11 // pred_fallthru
          _
      $region12: #{tpu_custom_call.1} parent=5 // pred_fallthru
        _
      %p109 = scmp.lt.s32.totalorder %s20, 2
      // Predicated region
      $region21: #{tpu_custom_call.1} parent=5 // pred_check
        %p110 = pneg %p109
      $region22: #{tpu_custom_call.1} parent=5 // pred_check_branch
        %112 = sbr.rel (%p110) target = $region24
      $region23: #{tpu_custom_call.1} parent=5 // pred_region
        _
      $region24: #{tpu_custom_call.1} parent=5 // pred_fallthru
        _
      %p113 = scmp.le.s32.totalorder 1, %s20
      %p114 = scmp.lt.s32.totalorder %s20, 3
      %p115 = pnand %p113, %p114
      %p116 = pneg %p115
      // Predicated region
      $region25: #{tpu_custom_call.1} parent=5 // pred_check
        _
      $region26: #{tpu_custom_call.1} parent=5 // pred_check_branch
        %118 = sbr.rel (%p115) target = $region28
      $region27: #{tpu_custom_call.1} parent=5 // pred_region
        %s119 = ssub.s32 %s20, 1
        %p120 = pneg %p41
        %p121 = pneg %p38
        %p122 = pneg %p62
        %p123 = pneg %p59
        %p124 = pneg %p88
        %p125 = pneg %p85
        %s126 = sand.u32 %s75, 1
        %s127 = scalar_lea.sflag [#allocation5], %s126
        %s128 = sand.u32 %s75, 1
        %s129 = smul.addr %s128, 8
        %s130 = scalar_lea.vmem [#allocation4], %s129
        %s131 = smul.u32 %s25, 128
        %s132 = sld [smem:[#allocation3 + %s131]]
        %s133 = scalar_lea.vmem %s2, %s132
        %v134 = vld [vmem:[%s133] sm:$0x1]
        %s135 = sadd.s32 %s131, 1
        %s136 = sld [smem:[#allocation3 + %s135]]
        %s137 = scalar_lea.vmem %s2, %s136
        %v138 = vld [vmem:[%s137] sm:$0x1]
        %s139 = sadd.s32 %s131, 2
        %s140 = sld [smem:[#allocation3 + %s139]]
        %s141 = scalar_lea.vmem %s2, %s140
        %v142 = vld [vmem:[%s141] sm:$0x1]
        %s143 = sadd.s32 %s131, 3
        %s144 = sld [smem:[#allocation3 + %s143]]
        %s145 = scalar_lea.vmem %s2, %s144
        %v146 = vld [vmem:[%s145] sm:$0x1]
        %s147 = sadd.s32 %s131, 4
        %s148 = sld [smem:[#allocation3 + %s147]]
        %s149 = scalar_lea.vmem %s2, %s148
        %v150 = vld [vmem:[%s149] sm:$0x1]
        %s151 = sadd.s32 %s131, 5
        %s152 = sld [smem:[#allocation3 + %s151]]
        %s153 = scalar_lea.vmem %s2, %s152
        %v154 = vld [vmem:[%s153] sm:$0x1]
        %s155 = sadd.s32 %s131, 6
        %s156 = sld [smem:[#allocation3 + %s155]]
        %s157 = scalar_lea.vmem %s2, %s156
        %v158 = vld [vmem:[%s157] sm:$0x1]
        %s159 = sadd.s32 %s131, 7
        %s160 = sld [smem:[#allocation3 + %s159]]
        %s161 = scalar_lea.vmem %s2, %s160
        %v162 = vld [vmem:[%s161] sm:$0x1]
        %v164 = vrot.slane %v138, 7
        %v167 = vrot.slane %v142, 6
        %v170 = vrot.slane %v146, 5
        %v173 = vrot.slane %v150, 4
        %v176 = vrot.slane %v154, 3
        %v179 = vrot.slane %v158, 2
        %v182 = vrot.slane %v162, 1
        %vm184 = vcmask 1040384
        %v185 = vsel %vm184, %v134, %v164
        %vm186 = vcmask 1041408
        %v187 = vsel %vm186, %v185, %v167
        %vm188 = vcmask 1042432
        %v189 = vsel %vm188, %v187, %v170
        %vm190 = vcmask 1043456
        %v191 = vsel %vm190, %v189, %v173
        %vm192 = vcmask 1044480
        %v193 = vsel %vm192, %v191, %v176
        %vm194 = vcmask 1045504
        %v195 = vsel %vm194, %v193, %v179
        %vm196 = vcmask 1046528
        %v197 = vsel %vm196, %v195, %v182
        %v198 = vmul.f32 %v197, 5.656854
        %v199 = vld [vmem:[%s1] sm:$0xff]
        %v200 = vadd.f32 %v198, %v199
        %vm201 = vcmask 261120
        %202 = vst.msk [vmem:[%s130] sm:$0xff] %vm201, %v200
        %s203 = sand.u32 %s75, 1
        %s204 = scalar_lea.sflag [#allocation5], %s203
        %s205 = sand.u32 %s75, 1
        %s206 = smul.addr %s205, 8
        %s207 = scalar_lea.vmem [#allocation4], %s206
        // Predicated region
        $region29: #{tpu_custom_call.1} parent=27 // pred_check
          %p208 = pneg %p85
        $region30: #{tpu_custom_call.1} parent=27 // pred_check_branch
          %210 = sbr.rel (%p208) target = $region32
        $region31: #{tpu_custom_call.1} parent=27 // pred_region
          %212 = vsyncadd %s204, 0
          %s213 = smul.addr %s25, 8
          %s214 = scalar_lea.hbm %s3, %s213
          %s216 = sshll.u32 %s207, 4
          %s217 = int_to_ptr.vmem [resolvable:$true] %s216
          %s218 = sshll.u32 %s214, 4
          %s219 = int_to_ptr.hbm [resolvable:$true] %s218
          %221 = dma.vmem_to_hbm [thread:$0]  %s217, 128, %s219, %s204
        $region32: #{tpu_custom_call.1} parent=27 // pred_fallthru
          _
      $region28: #{tpu_custom_call.1} parent=5 // pred_fallthru
        _
      %p222 = scmp.le.s32.totalorder 2, %s20
      // Predicated region
      $region33: #{tpu_custom_call.1} parent=5 // pred_check
        %p223 = pneg %p222
      $region34: #{tpu_custom_call.1} parent=5 // pred_check_branch
        %225 = sbr.rel (%p223) target = $region36
      $region35: #{tpu_custom_call.1} parent=5 // pred_region
        %s226 = ssub.s32 %s20, 2
        // Predicated region
        $region37: #{tpu_custom_call.1} parent=35 // pred_check
          %p227 = pneg %p91
        $region38: #{tpu_custom_call.1} parent=35 // pred_check_branch
          %229 = sbr.rel (%p227) target = $region40
        $region39: #{tpu_custom_call.1} parent=35 // pred_region
          %s230 = sand.u32 %s76, 1
          %s231 = scalar_lea.sflag [#allocation5], %s230
          %s232 = sand.u32 %s76, 1
          %s233 = smul.addr %s232, 8
          %s234 = scalar_lea.vmem [#allocation4], %s233
          %236 = dma.done %s231, 128
        $region40: #{tpu_custom_call.1} parent=35 // pred_fallthru
          _
      $region36: #{tpu_custom_call.1} parent=5 // pred_fallthru
        _
    $region6: #{tpu_custom_call.1} parent=1 // loop_footer
      %s24 = sadd.s32 1, %s20
    $region7: #{tpu_custom_call.1} parent=1 // loop_footer_branch
      %19 = sbr.rel target = $region3
    $region8: #{tpu_custom_call.1} parent=1 // loop_exit
      _
    %237 = vsyncpa [#allocation5], 1
    %s238 = scalar_lea.sflag [#allocation5], 1
    %239 = vsyncpa %s238, 1

</llo_original>
